<compile_context>
chip_gen: v5e
topology: v5e:2x2
jax: 0.10.0
libtpu: 0.0.40
codegen_flags: <defaults>
</compile_context>

<pallas_src>
import jax
import jax.numpy as jnp
from jax import lax
from jax.experimental import pallas as pl
from jax.experimental.pallas import tpu as pltpu

N, CIN, COUT, H, W = 2, 4, 8, 16, 16
EPS = 1e-5  # nn.BatchNorm2d default


def downsample_kernel(w_ref, p_ref, gb_ref, o_ref):
    # w_ref  : (COUT, 9*CIN)       bf16 conv weights, K flattened as (kh, kw, cin)
    # p_ref  : (9*CIN, 4*N*HO*WO)  bf16 im2col patches; the four 2x2 pool-window
    #                              positions are four contiguous 128-lane blocks
    # gb_ref : (COUT, 2) f32       column 0 = BN gamma, column 1 = BN beta
    # o_ref  : (COUT, N*HO*WO) f32 lane-dense output slab (one full (8,128) vreg)
    blk = o_ref.shape[1]

    # ---- 3x3 conv (padding=1): one bf16 matmul, f32 accumulate, on the MXU ----
    conv = jnp.dot(w_ref[...], p_ref[...],
                   preferred_element_type=jnp.float32)             # (COUT, 4*blk)

    # ---- BatchNorm2d, training-mode batch statistics (biased variance) ----
    # All elementwise work stays f32 (v5e VPU/EUP have no bf16 datapath).
    cnt = conv.shape[1]
    mean = jnp.sum(conv, axis=1, keepdims=True) * (1.0 / cnt)      # (COUT, 1)
    cen = conv - mean
    var = jnp.sum(cen * cen, axis=1, keepdims=True) * (1.0 / cnt)  # two-pass var
    scale = gb_ref[:, 0:1] * lax.rsqrt(var + EPS)
    y = cen * scale + gb_ref[:, 1:2]                               # (COUT, 4*blk)

    # ---- max_pool2d(2,2): elementwise max over the 4 aligned lane blocks ----
    p00 = y[:, 0 * blk:1 * blk]
    p01 = y[:, 1 * blk:2 * blk]
    p10 = y[:, 2 * blk:3 * blk]
    p11 = y[:, 3 * blk:4 * blk]
    pooled = jnp.maximum(jnp.maximum(p00, p01), jnp.maximum(p10, p11))

    # ---- ReLU after pool (max is monotone => same result, 4x fewer elems) ----
    o_ref[...] = jnp.maximum(pooled, 0.0)


def downsample_block(x_nchw, w_oihw, bias, gamma, beta):
    """Forward pass of DownsampleBlock. Input/output are NCHW like PyTorch."""
    # Conv bias cancels exactly under training-mode BN: mean(conv+b) = mean(conv)+b.
    del bias
    n, cin, h, w = x_nchw.shape
    cout = w_oihw.shape[0]
    ho, wo = h // 2, w // 2
    k = 9 * cin
    blk = n * ho * wo

    # ---- wrapper-side patch build (collapsed chain, everything in bf16) ----
    # (CIN, N, H, W) bf16, then pad=1 on the 4 KiB raw input — cheap & fusible.
    xb = jnp.transpose(x_nchw, (1, 0, 2, 3)).astype(jnp.bfloat16)
    xp = jnp.pad(xb, ((0, 0), (0, 0), (1, 1), (1, 1)))              # (CIN,N,H+2,W+2)

    # For each pool-window position (hb, wb) and tap (kh, kw), a stride-2 slice
    # picks exactly the inputs feeding output pixels (2*ho+hb, 2*wo+wb).  The
    # leading stack axis makes K = (kh, kw, cin) without transposing the
    # expanded data; concat order (hb, wb) gives the 4 contiguous lane blocks.
    blocks = []
    for hb in range(2):
        for wb in range(2):
            taps = [xp[:, :, hb + kh:hb + kh + 2 * ho:2,
                           wb + kw:wb + kw + 2 * wo:2]              # (CIN,N,HO,WO)
                    for kh in range(3) for kw in range(3)]
            blocks.append(jnp.stack(taps, axis=0).reshape(k, blk))  # (K, blk)
    p_t = jnp.concatenate(blocks, axis=1)                           # (K, 4*blk)

    # OIHW -> (COUT, K) with K flattened as (kh, kw, cin) to match p_t rows.
    w_t = jnp.transpose(w_oihw, (0, 2, 3, 1)).reshape(cout, k).astype(jnp.bfloat16)
    # Pack BN affine params into one small f32 operand: [:,0]=gamma, [:,1]=beta.
    gb = jnp.stack([gamma, beta], axis=1).astype(jnp.float32)       # (COUT, 2)

    # Gridless single invocation: BN batch stats couple the whole batch, the
    # whole problem fits comfortably in VMEM, and any grid step would cost more
    # than the kernel's compute at this size.
    out_t = pl.pallas_call(
        downsample_kernel,
        out_shape=jax.ShapeDtypeStruct((cout, blk), jnp.float32),
        in_specs=[pl.BlockSpec(memory_space=pltpu.MemorySpace.VMEM)] * 3,
        out_specs=pl.BlockSpec(memory_space=pltpu.MemorySpace.VMEM),
        compiler_params=pltpu.CompilerParams(vmem_limit_bytes=32 * 1024 * 1024),
    )(w_t, p_t, gb)

    # (COUT, N*HO*WO) lane-dense slab -> NCHW.  Pure layout plumbing on a 4 KiB
    # result; a consumer that accepts (COUT, N, HO, WO) could skip it.
    return jnp.transpose(out_t.reshape(cout, n, ho, wo), (1, 0, 2, 3))


def reference(x_nchw, w_oihw, bias, gamma, beta):
    """Pure-JAX reference replicating the PyTorch forward (training-mode BN)."""
    conv = lax.conv_general_dilated(
        x_nchw, w_oihw, window_strides=(1, 1), padding="SAME",
        dimension_numbers=("NCHW", "OIHW", "NCHW"),
    ) + bias.reshape(1, -1, 1, 1)
    mean = jnp.mean(conv, axis=(0, 2, 3), keepdims=True)
    var = jnp.mean((conv - mean) ** 2, axis=(0, 2, 3), keepdims=True)
    y = (conv - mean) * lax.rsqrt(var + EPS)
    y = y * gamma.reshape(1, -1, 1, 1) + beta.reshape(1, -1, 1, 1)
    y = jnp.maximum(y, 0.0)
    return lax.reduce_window(y, -jnp.inf, lax.max,
                             (1, 1, 2, 2), (1, 1, 2, 2), "VALID")


if __name__ == "__main__":
    key = jax.random.PRNGKey(0)
    kx, kw, kb = jax.random.split(key, 3)

    x = jax.random.normal(kx, (N, CIN, H, W), dtype=jnp.float32)
    # Deterministic synthetic parameters (shapes match nn.Conv2d / nn.BatchNorm2d).
    w_conv = 0.1 * jax.random.normal(kw, (COUT, CIN, 3, 3), dtype=jnp.float32)
    b_conv = 0.1 * jax.random.normal(kb, (COUT,), dtype=jnp.float32)
    gamma = jnp.ones((COUT,), jnp.float32)    # BatchNorm2d default weight
    beta = jnp.zeros((COUT,), jnp.float32)    # BatchNorm2d default bias

    out = downsample_block(x, w_conv, b_conv, gamma, beta)
    jax.block_until_ready(out)

    assert out.shape == (N, COUT, H // 2, W // 2)
    ref = reference(x, w_conv, b_conv, gamma, beta)
    # bf16 MXU operands (f32 accumulation): observed error is O(1e-3) on the
    # unit-scale normalized outputs; 2e-2 leaves comfortable margin.
    assert jnp.allclose(out, ref, rtol=2e-2, atol=2e-2)

    print("KERNEL_OK")
</pallas_src>

<mosaic_0001>
module attributes {stable_mosaic.version = 11 : i64} {
  func.func @downsample_kernel(%arg0: memref<8x36xbf16, #tpu.memory_space<vmem>>, %arg1: memref<36x512xbf16, #tpu.memory_space<vmem>>, %arg2: memref<8x2xf32, #tpu.memory_space<vmem>>, %arg3: memref<8x128xf32, #tpu.memory_space<vmem>>) attributes {dimension_semantics = [], scalar_prefetch = 0 : i64, scratch_operands = 0 : i64, tpu.core_type = #tpu.core_type<tc>} {
    %c0 = arith.constant 0 : index
    %c0_0 = arith.constant 0 : index
    %0 = vector.load %arg0[%c0, %c0_0] : memref<8x36xbf16, #tpu.memory_space<vmem>>, vector<8x36xbf16>
    %c0_1 = arith.constant 0 : index
    %c0_2 = arith.constant 0 : index
    %1 = vector.load %arg1[%c0_1, %c0_2] : memref<36x512xbf16, #tpu.memory_space<vmem>>, vector<36x512xbf16>
    %cst = arith.constant dense<0.000000e+00> : vector<8x512xf32>
    %2 = tpu.matmul %0, %1, %cst {dimension_numbers = #tpu.dot_dimension_numbers<[1], [0], [0], [1], [0, 0, 1, 1], [], []>} : vector<8x36xbf16>, vector<36x512xbf16>, vector<8x512xf32> -> vector<8x512xf32>
    %cst_3 = arith.constant dense<0.000000e+00> : vector<8xf32>
    %3 = vector.multi_reduction <add>, %2, %cst_3 [1] : vector<8x512xf32> to vector<8xf32>
    %4 = vector.shape_cast %3 : vector<8xf32> to vector<8x1xf32>
    %cst_4 = arith.constant 0.001953125 : f32
    %5 = vector.broadcast %cst_4 : f32 to vector<8x1xf32>
    %6 = arith.mulf %4, %5 : vector<8x1xf32>
    %7 = vector.broadcast %6 : vector<8x1xf32> to vector<8x512xf32>
    %8 = arith.subf %2, %7 : vector<8x512xf32>
    %9 = arith.mulf %8, %8 : vector<8x512xf32>
    %cst_5 = arith.constant dense<0.000000e+00> : vector<8xf32>
    %10 = vector.multi_reduction <add>, %9, %cst_5 [1] : vector<8x512xf32> to vector<8xf32>
    %11 = vector.shape_cast %10 : vector<8xf32> to vector<8x1xf32>
    %cst_6 = arith.constant 0.001953125 : f32
    %12 = vector.broadcast %cst_6 : f32 to vector<8x1xf32>
    %13 = arith.mulf %11, %12 : vector<8x1xf32>
    %c0_7 = arith.constant 0 : index
    %c0_8 = arith.constant 0 : index
    %14 = vector.load %arg2[%c0_7, %c0_8] : memref<8x2xf32, #tpu.memory_space<vmem>>, vector<8x1xf32>
    %cst_9 = arith.constant 9.99999974E-6 : f32
    %15 = vector.broadcast %cst_9 : f32 to vector<8x1xf32>
    %16 = arith.addf %13, %15 : vector<8x1xf32>
    %17 = math.rsqrt %16 : vector<8x1xf32>
    %18 = arith.mulf %14, %17 : vector<8x1xf32>
    %19 = vector.broadcast %18 : vector<8x1xf32> to vector<8x512xf32>
    %20 = arith.mulf %8, %19 : vector<8x512xf32>
    %c0_10 = arith.constant 0 : index
    %c1 = arith.constant 1 : index
    %21 = vector.load %arg2[%c0_10, %c1] : memref<8x2xf32, #tpu.memory_space<vmem>>, vector<8x1xf32>
    %22 = vector.broadcast %21 : vector<8x1xf32> to vector<8x512xf32>
    %23 = arith.addf %20, %22 : vector<8x512xf32>
    %24 = vector.extract_strided_slice %23 {offsets = [0, 0], sizes = [8, 128], strides = [1, 1]} : vector<8x512xf32> to vector<8x128xf32>
    %25 = vector.extract_strided_slice %23 {offsets = [0, 128], sizes = [8, 128], strides = [1, 1]} : vector<8x512xf32> to vector<8x128xf32>
    %26 = vector.extract_strided_slice %23 {offsets = [0, 256], sizes = [8, 128], strides = [1, 1]} : vector<8x512xf32> to vector<8x128xf32>
    %27 = vector.extract_strided_slice %23 {offsets = [0, 384], sizes = [8, 128], strides = [1, 1]} : vector<8x512xf32> to vector<8x128xf32>
    %28 = arith.maximumf %24, %25 : vector<8x128xf32>
    %29 = arith.maximumf %26, %27 : vector<8x128xf32>
    %30 = arith.maximumf %28, %29 : vector<8x128xf32>
    %cst_11 = arith.constant 0.000000e+00 : f32
    %31 = vector.broadcast %cst_11 : f32 to vector<8x128xf32>
    %32 = arith.maximumf %30, %31 : vector<8x128xf32>
    %c0_12 = arith.constant 0 : index
    %c0_13 = arith.constant 0 : index
    %33 = vector.load %arg3[%c0_12, %c0_13] : memref<8x128xf32, #tpu.memory_space<vmem>>, vector<8x128xf32>
    tpu.vector_store %arg3[%c0_12, %c0_13], %32 {strides = array<i32>} : memref<8x128xf32, #tpu.memory_space<vmem>>, vector<8x128xf32>,
    return
  }
}

</mosaic_0001>

<llo_original>
// kernel: tpu_custom_call.1
$region0: #{tpu_custom_call.1}
  #allocation0 [shape = 'u32[]', space=smem, size = 0x4, offset = 0x4, fixed_abs, tag = 'smem constant byte address 0x4 - core index']
  #allocation1 [shape = 'u32[72,128]{1,0:T(1,128)}', space=vmem, size = 0x9000, scoped, tag = 'internal scratch']
  %s0 = inlined_call_operand.vmem [shape: bf16[8,36], index: 0, kind: input, shape index: {}]
  %s1 = inlined_call_operand.hbm [shape: bf16[36,512], index: 1, kind: input, shape index: {}]
  %s2 = inlined_call_operand.vmem [shape: f32[8,2], index: 2, kind: input, shape index: {}]
  %s3 = inlined_call_operand.hbm [shape: f32[8,128], index: 3, kind: output, shape index: {}]
  %s4 = sld [smem:[#allocation0]]
  $region26: #{tpu_custom_call.1} parent=0
    _
  %s6 = ssub.s32 1, %s4
  %s7 = scalar_select 0, %s6, %s4
  $region1: #{tpu_custom_call.1} parent=0
    #allocation2 [shape = 'u8[40960]{0}', space=vmem, size = 0xa000, scoped, tag = 'input window, operand 1, single buffered']
    #allocation3 [shape = 's32[1]{0}', space=sflag, size = 0x4, scoped, tag = 'scoped memory for tpu_custom_call.1']
    #allocation4 [shape = 's32[1]{0}', space=sflag, size = 0x4, scoped, tag = 'scoped memory for tpu_custom_call.1']
    #allocation5 [shape = 'u8[4096]{0}', space=vmem, size = 0x1000, scoped, tag = 'output window, operand 0, single buffered']
    %8 = vsyncpa [#allocation3], 0
    %9 = vsyncpa [#allocation4], 0
    // Predicated region
    $region2: #{tpu_custom_call.1} parent=1 // pred_check
      _
    $region3: #{tpu_custom_call.1} parent=1 // pred_check_branch
      %11 = sbr.rel (0) target = $region5
    $region4: #{tpu_custom_call.1} parent=1 // pred_region
      _
    $region5: #{tpu_custom_call.1} parent=1 // pred_fallthru
      _
    // Predicated region
    $region6: #{tpu_custom_call.1} parent=1 // pred_check
      _
    $region7: #{tpu_custom_call.1} parent=1 // pred_check_branch
      %13 = sbr.rel (0) target = $region9
    $region8: #{tpu_custom_call.1} parent=1 // pred_region
      %15 = vsyncadd [#allocation3], 0
      %s16 = sshll.u32 %s1, 4
      %s17 = int_to_ptr.hbm [resolvable:$true] %s16
      %s18 = sshll.u32 [#allocation2], 4
      %s19 = int_to_ptr.vmem [resolvable:$true] %s18
      %24 = dma.hbm_to_vmem [thread:$0]  %s17, 1280, %s19, [#allocation3], 256, 256, 16
    $region9: #{tpu_custom_call.1} parent=1 // pred_fallthru
      _
    // Predicated region
    $region10: #{tpu_custom_call.1} parent=1 // pred_check
      _
    $region11: #{tpu_custom_call.1} parent=1 // pred_check_branch
      %26 = sbr.rel (0) target = $region13
    $region12: #{tpu_custom_call.1} parent=1 // pred_region
      _
    $region13: #{tpu_custom_call.1} parent=1 // pred_fallthru
      _
    // Predicated region
    $region14: #{tpu_custom_call.1} parent=1 // pred_check
      _
    $region15: #{tpu_custom_call.1} parent=1 // pred_check_branch
      %28 = sbr.rel (0) target = $region17
    $region16: #{tpu_custom_call.1} parent=1 // pred_region
      %30 = dma.done [#allocation3], 1280
    $region17: #{tpu_custom_call.1} parent=1 // pred_fallthru
      _
    %v32 = vld [vmem:[%s0] sm:$0xf]
    %v33 = vld [vmem:[#allocation2] sm:$0xff]
    %v34 = vld [vmem:[#allocation2 + $0x8] sm:$0xff]
    %v35 = vld [vmem:[#allocation2 + $0x10] sm:$0xff]
    %v36 = vld [vmem:[#allocation2 + $0x18] sm:$0xff]
    %v37 = vld [vmem:[#allocation2 + $0x20] sm:$0xff]
    %v38 = vld [vmem:[#allocation2 + $0x28] sm:$0xff]
    %v39 = vld [vmem:[#allocation2 + $0x30] sm:$0xff]
    %v40 = vld [vmem:[#allocation2 + $0x38] sm:$0xff]
    %v41 = vld [vmem:[#allocation2 + $0x40] sm:$0x33]
    %v42 = vld [vmem:[#allocation2 + $0x48] sm:$0x33]
    %v53 = vunpack.c.l.b16 %v33
    %v54 = vunpack.c.h.b16 %v33
    %v55 = vunpack.c.l.b16 %v34
    %v56 = vunpack.c.h.b16 %v34
    %v57 = vunpack.c.l.b16 %v35
    %v58 = vunpack.c.h.b16 %v35
    %v59 = vunpack.c.l.b16 %v36
    %v60 = vunpack.c.h.b16 %v36
    %v61 = vunpack.c.l.b16 %v37
    %v62 = vunpack.c.h.b16 %v37
    %v63 = vunpack.c.l.b16 %v38
    %v64 = vunpack.c.h.b16 %v38
    %v65 = vunpack.c.l.b16 %v39
    %v66 = vunpack.c.h.b16 %v39
    %v67 = vunpack.c.l.b16 %v40
    %v68 = vunpack.c.h.b16 %v40
    %v69 = vunpack.c.l.b16 %v41
    %v70 = vunpack.c.h.b16 %v41
    %v71 = vunpack.c.l.b16 %v42
    %v72 = vunpack.c.h.b16 %v42
    %v73 = vpack.c.b16 %v57, %v53
    %v74 = vpack.c.b16 %v58, %v54
    %v75 = vpack.c.b16 %v59, %v55
    %v76 = vpack.c.b16 %v60, %v56
    %v77 = vpack.c.b16 %v65, %v61
    %v78 = vpack.c.b16 %v66, %v62
    %v79 = vpack.c.b16 %v67, %v63
    %v80 = vpack.c.b16 %v68, %v64
    %v81 = vpack.c.b16 %v69, %v69
    %v82 = vpack.c.b16 %v70, %v70
    %v83 = vpack.c.b16 %v71, %v71
    %v84 = vpack.c.b16 %v72, %v72
    %vm93 = vcmask 293888
    %v95 = vsel %vm93, %v32, 0
    %vm97 = vcmask 1041408
    %v99 = vsel %vm97, %v81, 0
    %v102 = vsel %vm97, %v82, 0
    %v105 = vsel %vm97, %v83, 0
    %v108 = vsel %vm97, %v84, 0
    %110 = vmatpush.bf16.msra.mxu0 0
    %111 = vmatpush.bf16.msra.mxu0 0
    %112 = vmatpush.bf16.msra.mxu0 0
    %113 = vmatpush.bf16.msra.mxu0 0
    %114 = vmatpush.bf16.msra.mxu0 0
    %115 = vmatpush.bf16.msra.mxu0 %v99
    %116 = vmatpush.bf16.msra.mxu0 %v77
    %117 = vmatpush.bf16.msra.mxu0 %v73
    %118 = vmatmul.bf16.gmra.mxu0 %v95
    %v119 = vpop.f32.mrf.mxu0
    %v120 = vadd.f32 0.0, %v119
    %v121 = vpop.f32.mrf.mxu0
    %122 = vdwg.mxu0
    %123 = vmatpush.bf16.msra.mxu0 0
    %124 = vmatpush.bf16.msra.mxu0 0
    %125 = vmatpush.bf16.msra.mxu0 0
    %126 = vmatpush.bf16.msra.mxu0 0
    %127 = vmatpush.bf16.msra.mxu0 0
    %128 = vmatpush.bf16.msra.mxu0 %v102
    %129 = vmatpush.bf16.msra.mxu0 %v78
    %130 = vmatpush.bf16.msra.mxu0 %v74
    %131 = vmatmul.bf16.gmra.mxu0 %v95
    %v132 = vpop.f32.mrf.mxu0
    %v133 = vadd.f32 0.0, %v132
    %v134 = vpop.f32.mrf.mxu0
    %135 = vdwg.mxu0
    %136 = vmatpush.bf16.msra.mxu0 0
    %137 = vmatpush.bf16.msra.mxu0 0
    %138 = vmatpush.bf16.msra.mxu0 0
    %139 = vmatpush.bf16.msra.mxu0 0
    %140 = vmatpush.bf16.msra.mxu0 0
    %141 = vmatpush.bf16.msra.mxu0 %v105
    %142 = vmatpush.bf16.msra.mxu0 %v79
    %143 = vmatpush.bf16.msra.mxu0 %v75
    %144 = vmatmul.bf16.gmra.mxu0 %v95
    %v145 = vpop.f32.mrf.mxu0
    %v146 = vadd.f32 0.0, %v145
    %v147 = vpop.f32.mrf.mxu0
    %148 = vdwg.mxu0
    %149 = vmatpush.bf16.msra.mxu0 0
    %150 = vmatpush.bf16.msra.mxu0 0
    %151 = vmatpush.bf16.msra.mxu0 0
    %152 = vmatpush.bf16.msra.mxu0 0
    %153 = vmatpush.bf16.msra.mxu0 0
    %154 = vmatpush.bf16.msra.mxu0 %v108
    %155 = vmatpush.bf16.msra.mxu0 %v80
    %156 = vmatpush.bf16.msra.mxu0 %v76
    %157 = vmatmul.bf16.gmra.mxu0 %v95
    %v158 = vpop.f32.mrf.mxu0
    %v159 = vadd.f32 0.0, %v158
    %v160 = vpop.f32.mrf.mxu0
    %161 = vdwg.mxu0
    %v162 = vadd.f32 %v120, %v133
    %v163 = vadd.f32 %v162, %v146
    %v164 = vadd.f32 %v163, %v159
    %165 = vadd.xlane.f32.xlu0 %v164
    %v166 = vpop.xlane.xlu0 %165
    %v167 = vmul.f32 %v166, 0.001953125
    %v168 = vsub.f32 %v120, %v167
    %v169 = vsub.f32 %v133, %v167
    %v170 = vsub.f32 %v146, %v167
    %v171 = vsub.f32 %v159, %v167
    %v172 = vmul.f32 %v168, %v168
    %v173 = vmul.f32 %v169, %v169
    %v174 = vmul.f32 %v170, %v170
    %v175 = vmul.f32 %v171, %v171
    %v176 = vadd.f32 %v172, %v173
    %v177 = vadd.f32 %v176, %v174
    %v178 = vadd.f32 %v177, %v175
    %179 = vadd.xlane.f32.xlu0 %v178
    %v180 = vpop.xlane.xlu0 %179
    %v181 = vmul.f32 %v180, 0.001953125
    %v182 = vld [vmem:[%s2] sm:$0xff]
    %v183 = vadd.f32 %v181, 1e-05
    %v184 = vrsqrt.pop %v183
    %v185 = vmul.f32 %v184, %v183
    %v186 = vmul.f32 %v185, %v184
    %v187 = vmul.f32 0.5, %v186
    %v188 = vsub.f32 1.5, %v187
    %v189 = vmul.f32 %v184, %v188
    %vm190 = vweird.f32 %v183
    %vm191 = vweird.f32 %v184
    %vm192 = vmor %vm190, %vm191
    %v193 = vsel %vm192, %v184, %v189
    %v194 = vmul.f32 %v182, %v193
    %196 = vset.pattern.permute.xlu0 0
    %197 = vperm.xlu0 %196, %v194
    %v198 = vpop.permute.xlu0 %197
    %v200 = vmul.f32 %v168, %v198
    %v201 = vmul.f32 %v169, %v198
    %v202 = vmul.f32 %v170, %v198
    %v203 = vmul.f32 %v171, %v198
    %205 = vset.pattern.permute.xlu0 1
    %206 = vperm.xlu0 %205, %v182
    %v207 = vpop.permute.xlu0 %206
    %v209 = vadd.f32 %v200, %v207
    %v210 = vadd.f32 %v201, %v207
    %v211 = vadd.f32 %v202, %v207
    %v212 = vadd.f32 %v203, %v207
    %v213 = vmax.f32 %v209, %v210
    %v214 = vmax.f32 %v211, %v212
    %v215 = vmax.f32 %v213, %v214
    %v216 = vmax.f32 %v215, 0.0
    %217 = vst [vmem:[#allocation5] sm:$0xff] %v216
    // Predicated region
    $region18: #{tpu_custom_call.1} parent=1 // pred_check
      _
    $region19: #{tpu_custom_call.1} parent=1 // pred_check_branch
      %219 = sbr.rel (0) target = $region21
    $region20: #{tpu_custom_call.1} parent=1 // pred_region
      %221 = vsyncadd [#allocation4], 0
      %s223 = sshll.u32 [#allocation5], 4
      %s224 = int_to_ptr.vmem [resolvable:$true] %s223
      %s225 = sshll.u32 %s3, 4
      %s226 = int_to_ptr.hbm [resolvable:$true] %s225
      %228 = dma.vmem_to_hbm [thread:$0]  %s224, 128, %s226, [#allocation4]
    $region21: #{tpu_custom_call.1} parent=1 // pred_fallthru
      _
    // Predicated region
    $region22: #{tpu_custom_call.1} parent=1 // pred_check
      _
    $region23: #{tpu_custom_call.1} parent=1 // pred_check_branch
      %230 = sbr.rel (0) target = $region25
    $region24: #{tpu_custom_call.1} parent=1 // pred_region
      %232 = dma.done [#allocation4], 128
    $region25: #{tpu_custom_call.1} parent=1 // pred_fallthru
      _
    %233 = vsyncpa [#allocation3], 1
    %234 = vsyncpa [#allocation4], 1

</llo_original>
